<compile_context>
chip_gen: v7x
topology: tpu7x:2x2x1
jax: 0.10.0
libtpu: 0.0.40
codegen_flags: <defaults>
</compile_context>

<pallas_src>
import functools

import jax
import jax.numpy as jnp
from jax import lax
from jax.experimental import pallas as pl
from jax.experimental.pallas import tpu as pltpu


def _round_up(x, m):
    return ((x + m - 1) // m) * m


def _cdiv(a, b):
    return (a + b - 1) // b


def _gru_kernel(gi_ref, w_hh_ref, b_hn_ref, w_fc_ref, b_fc_ref, out_ref, h_ref,
                *, seq_len, ragged, n_chains, unroll, precision):
    """One (batch block, time chunk) grid step of the GRU recurrence.

    gi_ref:   (T_TILE, B_TILE, 3*HP) precomputed x-side gates (r,z,n), biases folded in
    w_hh_ref: (HP, 3*HP)             hidden->gates weights
    b_hn_ref: (1, HP)                hidden-side bias of the n gate (stays inside r*(...))
    w_fc_ref: (HP, OP)               final Linear weights
    b_fc_ref: (1, OP)                final Linear bias
    out_ref:  (B_TILE, OP)           output block (written at the last time chunk)
    h_ref:    (B_TILE, HP)           VMEM scratch carrying h across time chunks
    """
    t_idx = pl.program_id(1)
    n_t = pl.num_programs(1)
    t_tile, b_tile, three_hp = gi_ref.shape
    hp = three_hp // 3
    sub = b_tile // n_chains

    @pl.when(t_idx == 0)
    def _init():
        h_ref[...] = jnp.zeros_like(h_ref)

    # Hoisted (loop-invariant) broadcast of the hidden-side n-gate bias.
    b_hn = jnp.broadcast_to(b_hn_ref[...], (sub, hp))
    t_base = t_idx * t_tile

    def step(tt, hs):
        gi_t = gi_ref[tt]                              # (B_TILE, 3*HP) VMEM load per step
        if ragged:
            # Exact arithmetic blend: padded tail steps leave h unchanged bit-for-bit
            # (all values are finite, so 0*x == 0 and 1*x == x hold exactly).
            mask = (t_base + tt < seq_len).astype(jnp.float32)
        new_hs = []
        # Independent batch sub-chains: the serial h-dependency only exists within a
        # chain, so the MXU matmul of one chain overlaps the EUP/VPU gate math of the
        # other across steps.
        for c in range(n_chains):
            h_c = hs[c]
            gi_c = gi_t[c * sub:(c + 1) * sub, :]
            gh = jnp.dot(h_c, w_hh_ref[...],
                         preferred_element_type=jnp.float32, precision=precision)
            # Lane-aligned gate slices (hp is a multiple of 128).
            r = jax.nn.sigmoid(gi_c[:, 0:hp] + gh[:, 0:hp])
            z = jax.nn.sigmoid(gi_c[:, hp:2 * hp] + gh[:, hp:2 * hp])
            n = jnp.tanh(gi_c[:, 2 * hp:3 * hp] + r * (gh[:, 2 * hp:3 * hp] + b_hn))
            h_new = n + z * (h_c - n)                  # == (1-z)*n + z*h
            if ragged:
                h_new = mask * h_new + (1.0 - mask) * h_c
            new_hs.append(h_new)
        return tuple(new_hs)

    h0 = h_ref[...]
    hs0 = tuple(h0[c * sub:(c + 1) * sub, :] for c in range(n_chains))
    hs = lax.fori_loop(0, t_tile, step, hs0, unroll=unroll)
    h_fin = hs[0] if n_chains == 1 else jnp.concatenate(hs, axis=0)
    h_ref[...] = h_fin

    # Final Linear on the last hidden state, only at the last time chunk.
    @pl.when(t_idx == n_t - 1)
    def _final():
        out_ref[...] = (jnp.dot(h_fin, w_fc_ref[...],
                                preferred_element_type=jnp.float32,
                                precision=precision)
                        + b_fc_ref[...]).astype(out_ref.dtype)


@functools.partial(jax.jit, static_argnames=("t_tile", "high_precision"))
def gru_model_forward(x, w_ih, w_hh, b_ih, b_hh, w_fc, b_fc, *,
                      t_tile=32, high_precision=False):
    """x: (B, T, I) batch_first like the PyTorch module.  Returns (B, O)."""
    f32 = jnp.float32
    B, T, I = x.shape
    H = w_hh.shape[0]
    O = w_fc.shape[1]
    precision = lax.Precision.HIGHEST if high_precision else None

    # ---- hardware-friendly padded sizes -------------------------------------
    HP = _round_up(H, 128)     # lane-aligned gate width
    OP = _round_up(O, 128)     # lane-dense output store

    # Batch tile: at most 256 rows (fills v6e/v7x's 256-wide MXU), but prefer >=2
    # batch blocks so the "parallel" grid axis can feed v7x's second TensorCore.
    B_TILE = min(256, _round_up(B, 8))
    if B_TILE >= 16 and _round_up(B, B_TILE) // B_TILE < 2:
        B_TILE = _round_up(B_TILE // 2, 8)
    BP = _round_up(B, B_TILE)
    nb = BP // B_TILE
    n_chains = 2 if B_TILE >= 16 else 1

    # ---- generation-aware VMEM budget ---------------------------------------
    try:
        vmem_cap = int(pltpu.get_tpu_info().vmem_capacity_bytes)
    except Exception:
        vmem_cap = 64 * 1024 * 1024          # conservative (v7x-sized) fallback
    vmem_limit = int(min(vmem_cap * 3 // 4, 96 * 1024 * 1024))

    weight_bytes = (HP * 3 * HP + HP * OP + HP + OP) * 4
    single_buffer_weights = 2 * weight_bytes > 8 * 1024 * 1024

    def vmem_estimate(tt_):
        gi_blk = 2 * tt_ * B_TILE * 3 * HP * 4               # double-buffered stream
        w_blk = (1 if single_buffer_weights else 2) * weight_bytes
        out_blk = 2 * B_TILE * OP * 4
        scratch = B_TILE * HP * 4
        return gi_blk + w_blk + out_blk + scratch

    # ---- time tiling: large balanced chunks, ragged tail masked in-kernel ----
    T_TILE = _cdiv(T, _cdiv(T, max(1, min(int(t_tile), T))))
    while T_TILE > 1 and vmem_estimate(T_TILE) > (vmem_limit * 4) // 5:
        T_TILE = (T_TILE + 1) // 2
    nt = _cdiv(T, T_TILE)
    T_TILE = _cdiv(T, nt)                    # rebalance after any VMEM shrink
    TP = nt * T_TILE
    ragged = TP != T
    unroll = T_TILE if T_TILE <= 8 else 4    # LLO visibility with bounded code size

    # ---- host-side weight layout prep ----------------------------------------
    w_ih = w_ih.astype(f32)
    w_hh = w_hh.astype(f32)
    b_ih = b_ih.astype(f32)
    b_hh = b_hh.astype(f32)

    def pad_gate_cols(w):
        # (rows, 3H), gate order [r,z,n] -> (rows, 3*HP), each gate lane-aligned.
        r_, z_, n_ = jnp.split(w, 3, axis=1)
        pad = lambda g: jnp.pad(g, ((0, 0), (0, HP - H)))
        return jnp.concatenate([pad(r_), pad(z_), pad(n_)], axis=1)

    def pad_gate_vec(v):
        r_, z_, n_ = jnp.split(v, 3)
        pad = lambda g: jnp.pad(g, (0, HP - H))
        return jnp.concatenate([pad(r_), pad(z_), pad(n_)])

    w_ih_p = pad_gate_cols(w_ih)                                       # (I, 3HP)
    w_hh_p = jnp.pad(pad_gate_cols(w_hh), ((0, HP - H), (0, 0)))       # (HP, 3HP)

    # Fold b_ih (all gates) and b_hh (r,z gates) into the precomputed gi bias;
    # b_hh of the n gate must stay inside r * (W_hn h + b_hn).
    b_gi = pad_gate_vec(b_ih + b_hh.at[2 * H:].set(0.0))               # (3HP,)
    b_hn = jnp.pad(b_hh[2 * H:], (0, HP - H)).reshape(1, HP)           # (1, HP)

    w_fc_p = jnp.pad(w_fc.astype(f32), ((0, HP - H), (0, OP - O)))     # (HP, OP)
    b_fc_p = jnp.pad(b_fc.astype(f32), (0, OP - O)).reshape(1, OP)     # (1, OP)

    # ---- input projection outside the kernel (one big lane-dense XLA matmul) ----
    x_p = jnp.pad(x.astype(f32), ((0, BP - B), (0, TP - T), (0, 0)))   # (BP, TP, I)
    gi = jnp.einsum("bti,ig->tbg", x_p, w_ih_p,
                    precision=precision) + b_gi[None, None, :]         # (TP, BP, 3HP)

    # ---- Pallas call ----------------------------------------------------------
    const = lambda b, t: (0, 0)   # weights/biases stay VMEM-resident across the grid

    def resident_spec(shape):
        if single_buffer_weights:
            try:
                # Single-buffer large invariant weights (saves half their VMEM).
                return pl.BlockSpec(shape, const, pipeline_mode=pl.Buffered(1))
            except Exception:
                pass  # fall back to default double-buffering if unsupported
        return pl.BlockSpec(shape, const)

    kernel = functools.partial(_gru_kernel, seq_len=T, ragged=ragged,
                               n_chains=n_chains, unroll=unroll, precision=precision)

    out = pl.pallas_call(
        kernel,
        out_shape=jax.ShapeDtypeStruct((BP, OP), f32),
        grid_spec=pltpu.PrefetchScalarGridSpec(
            num_scalar_prefetch=0,
            grid=(nb, nt),
            in_specs=[
                pl.BlockSpec((T_TILE, B_TILE, 3 * HP), lambda b, t: (t, b, 0)),
                resident_spec((HP, 3 * HP)),
                resident_spec((1, HP)),
                resident_spec((HP, OP)),
                resident_spec((1, OP)),
            ],
            out_specs=pl.BlockSpec((B_TILE, OP), lambda b, t: (b, 0)),
            scratch_shapes=[pltpu.VMEM((B_TILE, HP), jnp.float32)],
        ),
        compiler_params=pltpu.CompilerParams(
            dimension_semantics=("parallel", "arbitrary"),
            vmem_limit_bytes=vmem_limit,
        ),
    )(gi, w_hh_p, b_hn, w_fc_p, b_fc_p)

    return out[:B, :O]


def _reference_forward(x, w_ih, w_hh, b_ih, b_hh, w_fc, b_fc):
    """Pure-JAX reference matching torch.nn.GRU (batch_first) + Linear."""
    B = x.shape[0]
    H = w_hh.shape[0]

    def cell(h, x_t):
        gi = x_t @ w_ih + b_ih
        gh = h @ w_hh + b_hh
        i_r, i_z, i_n = jnp.split(gi, 3, axis=-1)
        h_r, h_z, h_n = jnp.split(gh, 3, axis=-1)
        r = jax.nn.sigmoid(i_r + h_r)
        z = jax.nn.sigmoid(i_z + h_z)
        n = jnp.tanh(i_n + r * h_n)
        return (1.0 - z) * n + z * h, None

    h0 = jnp.zeros((B, H), jnp.float32)
    h_last, _ = lax.scan(cell, h0, jnp.transpose(x, (1, 0, 2)))
    return h_last @ w_fc + b_fc


def _make_inputs(key, B, T, I, H, O):
    ks = jax.random.split(key, 7)
    bound = float(1.0 / (H ** 0.5))
    x = jax.random.normal(ks[0], (B, T, I), jnp.float32)
    # PyTorch stores weight_ih_l0 as (3H, I); we keep the right-multiply transpose.
    w_ih = jax.random.uniform(ks[1], (I, 3 * H), jnp.float32, -bound, bound)
    w_hh = jax.random.uniform(ks[2], (H, 3 * H), jnp.float32, -bound, bound)
    b_ih = jax.random.uniform(ks[3], (3 * H,), jnp.float32, -bound, bound)
    b_hh = jax.random.uniform(ks[4], (3 * H,), jnp.float32, -bound, bound)
    w_fc = jax.random.uniform(ks[5], (H, O), jnp.float32, -bound, bound)
    b_fc = jax.random.uniform(ks[6], (O,), jnp.float32, -bound, bound)
    return x, w_ih, w_hh, b_ih, b_hh, w_fc, b_fc


if __name__ == "__main__":
    key = jax.random.PRNGKey(0)
    # Small shapes consistent with the module (input=8, hidden=32, output=4).
    # Three configs exercise: cross-chunk h carry, the ragged-tail mask, and the
    # multi-batch-block / two-sub-chain interleave paths.
    cases = [
        (2, 8, 8, 32, 4, 4),    # 2 time chunks, single batch block
        (2, 7, 8, 32, 4, 4),    # ragged tail: 2 chunks of 4 with 1 masked step
        (20, 8, 8, 32, 4, 4),   # 2 batch blocks of 16 rows, 2 sub-chains each
    ]
    keys = jax.random.split(key, len(cases))
    for cs_key, (B, T, I, H, O, tt) in zip(keys, cases):
        args = _make_inputs(cs_key, B, T, I, H, O)
        out = jax.block_until_ready(gru_model_forward(*args, t_tile=tt))
        ref = _reference_forward(*args)
        assert out.shape == (B, O)
        assert jnp.allclose(out, ref, atol=2e-5, rtol=2e-5), \
            f"mismatch vs reference (B={B}, T={T})"
    print("KERNEL_OK")
</pallas_src>

<mosaic_0001>
module attributes {stable_mosaic.version = 11 : i64} {
  func.func @_gru_kernel(%arg0: i32, %arg1: i32, %arg2: memref<4x8x384xf32, #tpu.memory_space<vmem>>, %arg3: memref<128x384xf32, #tpu.memory_space<vmem>>, %arg4: memref<1x128xf32, #tpu.memory_space<vmem>>, %arg5: memref<128x128xf32, #tpu.memory_space<vmem>>, %arg6: memref<1x128xf32, #tpu.memory_space<vmem>>, %arg7: memref<8x128xf32, #tpu.memory_space<vmem>>, %arg8: memref<8x128xf32, #tpu.memory_space<vmem>>) attributes {dimension_semantics = [#tpu.dimension_semantics<parallel>, #tpu.dimension_semantics<arbitrary>], iteration_bounds = array<i64: 1, 2>, scalar_prefetch = 0 : i64, scratch_operands = 1 : i64, tpu.core_type = #tpu.core_type<tc>, window_params = [{transform_indices = @transform_0, window_bounds = array<i64: 4, 8, 384>}, {pipeline_mode = #tpu.pipeline_mode<synchronous>, transform_indices = @transform_1, window_bounds = array<i64: 128, 384>}, {pipeline_mode = #tpu.pipeline_mode<synchronous>, transform_indices = @transform_2, window_bounds = array<i64: 1, 128>}, {pipeline_mode = #tpu.pipeline_mode<synchronous>, transform_indices = @transform_3, window_bounds = array<i64: 128, 128>}, {pipeline_mode = #tpu.pipeline_mode<synchronous>, transform_indices = @transform_4, window_bounds = array<i64: 1, 128>}, {transform_indices = @transform_5, window_bounds = array<i64: 8, 128>}]} {
    %c0_i32 = arith.constant 0 : i32
    %0 = arith.cmpi eq, %arg1, %c0_i32 : i32
    %1 = arith.extui %0 : i1 to i32
    %c0_i32_0 = arith.constant 0 : i32
    %2 = arith.cmpi ne, %1, %c0_i32_0 : i32
    scf.if %2 {
      %cst_36 = arith.constant 0.000000e+00 : f32
      %131 = vector.broadcast %cst_36 : f32 to vector<8x128xf32>
      %c0_37 = arith.constant 0 : index
      %c0_38 = arith.constant 0 : index
      %132 = vector.load %arg8[%c0_37, %c0_38] : memref<8x128xf32, #tpu.memory_space<vmem>>, vector<8x128xf32>
      tpu.vector_store %arg8[%c0_37, %c0_38], %131 {strides = array<i32>} : memref<8x128xf32, #tpu.memory_space<vmem>>, vector<8x128xf32>,
    } else {
    }
    %c0 = arith.constant 0 : index
    %c0_1 = arith.constant 0 : index
    %3 = vector.load %arg4[%c0, %c0_1] : memref<1x128xf32, #tpu.memory_space<vmem>>, vector<1x128xf32>
    %4 = vector.shape_cast %3 : vector<1x128xf32> to vector<1x128xf32>
    %5 = vector.broadcast %4 : vector<1x128xf32> to vector<8x128xf32>
    %c0_2 = arith.constant 0 : index
    %c0_3 = arith.constant 0 : index
    %6 = vector.load %arg8[%c0_2, %c0_3] : memref<8x128xf32, #tpu.memory_space<vmem>>, vector<8x128xf32>
    %c0_i32_4 = arith.constant 0 : i32
    %7 = arith.index_cast %c0_i32_4 : i32 to index
    %c0_5 = arith.constant 0 : index
    %c0_6 = arith.constant 0 : index
    %8 = vector.load %arg2[%7, %c0_5, %c0_6] : memref<4x8x384xf32, #tpu.memory_space<vmem>>, vector<1x8x384xf32>
    %9 = vector.shape_cast %8 : vector<1x8x384xf32> to vector<8x384xf32>
    %c0_7 = arith.constant 0 : index
    %c0_8 = arith.constant 0 : index
    %10 = vector.load %arg3[%c0_7, %c0_8] : memref<128x384xf32, #tpu.memory_space<vmem>>, vector<128x384xf32>
    %cst = arith.constant dense<0.000000e+00> : vector<8x384xf32>
    %11 = tpu.matmul %6, %10, %cst {dimension_numbers = #tpu.dot_dimension_numbers<[1], [0], [0], [1], [0, 0, 1, 1], [], []>} : vector<8x128xf32>, vector<128x384xf32>, vector<8x384xf32> -> vector<8x384xf32>
    %12 = vector.extract_strided_slice %9 {offsets = [0, 0], sizes = [8, 128], strides = [1, 1]} : vector<8x384xf32> to vector<8x128xf32>
    %13 = vector.extract_strided_slice %11 {offsets = [0, 0], sizes = [8, 128], strides = [1, 1]} : vector<8x384xf32> to vector<8x128xf32>
    %14 = arith.addf %12, %13 : vector<8x128xf32>
    %15 = arith.negf %14 : vector<8x128xf32>
    %16 = math.exp %15 : vector<8x128xf32>
    %cst_9 = arith.constant 1.000000e+00 : f32
    %17 = vector.broadcast %cst_9 : f32 to vector<8x128xf32>
    %18 = arith.addf %17, %16 : vector<8x128xf32>
    %19 = arith.divf %17, %18 : vector<8x128xf32>
    %20 = vector.extract_strided_slice %9 {offsets = [0, 128], sizes = [8, 128], strides = [1, 1]} : vector<8x384xf32> to vector<8x128xf32>
    %21 = vector.extract_strided_slice %11 {offsets = [0, 128], sizes = [8, 128], strides = [1, 1]} : vector<8x384xf32> to vector<8x128xf32>
    %22 = arith.addf %20, %21 : vector<8x128xf32>
    %23 = arith.negf %22 : vector<8x128xf32>
    %24 = math.exp %23 : vector<8x128xf32>
    %cst_10 = arith.constant 1.000000e+00 : f32
    %25 = vector.broadcast %cst_10 : f32 to vector<8x128xf32>
    %26 = arith.addf %25, %24 : vector<8x128xf32>
    %27 = arith.divf %25, %26 : vector<8x128xf32>
    %28 = vector.extract_strided_slice %9 {offsets = [0, 256], sizes = [8, 128], strides = [1, 1]} : vector<8x384xf32> to vector<8x128xf32>
    %29 = vector.extract_strided_slice %11 {offsets = [0, 256], sizes = [8, 128], strides = [1, 1]} : vector<8x384xf32> to vector<8x128xf32>
    %30 = arith.addf %29, %5 : vector<8x128xf32>
    %31 = arith.mulf %19, %30 : vector<8x128xf32>
    %32 = arith.addf %28, %31 : vector<8x128xf32>
    %33 = math.tanh %32 : vector<8x128xf32>
    %34 = arith.subf %6, %33 : vector<8x128xf32>
    %35 = arith.mulf %27, %34 : vector<8x128xf32>
    %36 = arith.addf %33, %35 : vector<8x128xf32>
    %c1_i32 = arith.constant 1 : i32
    %37 = arith.index_cast %c1_i32 : i32 to index
    %c0_11 = arith.constant 0 : index
    %c0_12 = arith.constant 0 : index
    %38 = vector.load %arg2[%37, %c0_11, %c0_12] : memref<4x8x384xf32, #tpu.memory_space<vmem>>, vector<1x8x384xf32>
    %39 = vector.shape_cast %38 : vector<1x8x384xf32> to vector<8x384xf32>
    %c0_13 = arith.constant 0 : index
    %c0_14 = arith.constant 0 : index
    %40 = vector.load %arg3[%c0_13, %c0_14] : memref<128x384xf32, #tpu.memory_space<vmem>>, vector<128x384xf32>
    %cst_15 = arith.constant dense<0.000000e+00> : vector<8x384xf32>
    %41 = tpu.matmul %36, %40, %cst_15 {dimension_numbers = #tpu.dot_dimension_numbers<[1], [0], [0], [1], [0, 0, 1, 1], [], []>} : vector<8x128xf32>, vector<128x384xf32>, vector<8x384xf32> -> vector<8x384xf32>
    %42 = vector.extract_strided_slice %39 {offsets = [0, 0], sizes = [8, 128], strides = [1, 1]} : vector<8x384xf32> to vector<8x128xf32>
    %43 = vector.extract_strided_slice %41 {offsets = [0, 0], sizes = [8, 128], strides = [1, 1]} : vector<8x384xf32> to vector<8x128xf32>
    %44 = arith.addf %42, %43 : vector<8x128xf32>
    %45 = arith.negf %44 : vector<8x128xf32>
    %46 = math.exp %45 : vector<8x128xf32>
    %cst_16 = arith.constant 1.000000e+00 : f32
    %47 = vector.broadcast %cst_16 : f32 to vector<8x128xf32>
    %48 = arith.addf %47, %46 : vector<8x128xf32>
    %49 = arith.divf %47, %48 : vector<8x128xf32>
    %50 = vector.extract_strided_slice %39 {offsets = [0, 128], sizes = [8, 128], strides = [1, 1]} : vector<8x384xf32> to vector<8x128xf32>
    %51 = vector.extract_strided_slice %41 {offsets = [0, 128], sizes = [8, 128], strides = [1, 1]} : vector<8x384xf32> to vector<8x128xf32>
    %52 = arith.addf %50, %51 : vector<8x128xf32>
    %53 = arith.negf %52 : vector<8x128xf32>
    %54 = math.exp %53 : vector<8x128xf32>
    %cst_17 = arith.constant 1.000000e+00 : f32
    %55 = vector.broadcast %cst_17 : f32 to vector<8x128xf32>
    %56 = arith.addf %55, %54 : vector<8x128xf32>
    %57 = arith.divf %55, %56 : vector<8x128xf32>
    %58 = vector.extract_strided_slice %39 {offsets = [0, 256], sizes = [8, 128], strides = [1, 1]} : vector<8x384xf32> to vector<8x128xf32>
    %59 = vector.extract_strided_slice %41 {offsets = [0, 256], sizes = [8, 128], strides = [1, 1]} : vector<8x384xf32> to vector<8x128xf32>
    %60 = arith.addf %59, %5 : vector<8x128xf32>
    %61 = arith.mulf %49, %60 : vector<8x128xf32>
    %62 = arith.addf %58, %61 : vector<8x128xf32>
    %63 = math.tanh %62 : vector<8x128xf32>
    %64 = arith.subf %36, %63 : vector<8x128xf32>
    %65 = arith.mulf %57, %64 : vector<8x128xf32>
    %66 = arith.addf %63, %65 : vector<8x128xf32>
    %c2_i32 = arith.constant 2 : i32
    %67 = arith.index_cast %c2_i32 : i32 to index
    %c0_18 = arith.constant 0 : index
    %c0_19 = arith.constant 0 : index
    %68 = vector.load %arg2[%67, %c0_18, %c0_19] : memref<4x8x384xf32, #tpu.memory_space<vmem>>, vector<1x8x384xf32>
    %69 = vector.shape_cast %68 : vector<1x8x384xf32> to vector<8x384xf32>
    %c0_20 = arith.constant 0 : index
    %c0_21 = arith.constant 0 : index
    %70 = vector.load %arg3[%c0_20, %c0_21] : memref<128x384xf32, #tpu.memory_space<vmem>>, vector<128x384xf32>
    %cst_22 = arith.constant dense<0.000000e+00> : vector<8x384xf32>
    %71 = tpu.matmul %66, %70, %cst_22 {dimension_numbers = #tpu.dot_dimension_numbers<[1], [0], [0], [1], [0, 0, 1, 1], [], []>} : vector<8x128xf32>, vector<128x384xf32>, vector<8x384xf32> -> vector<8x384xf32>
    %72 = vector.extract_strided_slice %69 {offsets = [0, 0], sizes = [8, 128], strides = [1, 1]} : vector<8x384xf32> to vector<8x128xf32>
    %73 = vector.extract_strided_slice %71 {offsets = [0, 0], sizes = [8, 128], strides = [1, 1]} : vector<8x384xf32> to vector<8x128xf32>
    %74 = arith.addf %72, %73 : vector<8x128xf32>
    %75 = arith.negf %74 : vector<8x128xf32>
    %76 = math.exp %75 : vector<8x128xf32>
    %cst_23 = arith.constant 1.000000e+00 : f32
    %77 = vector.broadcast %cst_23 : f32 to vector<8x128xf32>
    %78 = arith.addf %77, %76 : vector<8x128xf32>
    %79 = arith.divf %77, %78 : vector<8x128xf32>
    %80 = vector.extract_strided_slice %69 {offsets = [0, 128], sizes = [8, 128], strides = [1, 1]} : vector<8x384xf32> to vector<8x128xf32>
    %81 = vector.extract_strided_slice %71 {offsets = [0, 128], sizes = [8, 128], strides = [1, 1]} : vector<8x384xf32> to vector<8x128xf32>
    %82 = arith.addf %80, %81 : vector<8x128xf32>
    %83 = arith.negf %82 : vector<8x128xf32>
    %84 = math.exp %83 : vector<8x128xf32>
    %cst_24 = arith.constant 1.000000e+00 : f32
    %85 = vector.broadcast %cst_24 : f32 to vector<8x128xf32>
    %86 = arith.addf %85, %84 : vector<8x128xf32>
    %87 = arith.divf %85, %86 : vector<8x128xf32>
    %88 = vector.extract_strided_slice %69 {offsets = [0, 256], sizes = [8, 128], strides = [1, 1]} : vector<8x384xf32> to vector<8x128xf32>
    %89 = vector.extract_strided_slice %71 {offsets = [0, 256], sizes = [8, 128], strides = [1, 1]} : vector<8x384xf32> to vector<8x128xf32>
    %90 = arith.addf %89, %5 : vector<8x128xf32>
    %91 = arith.mulf %79, %90 : vector<8x128xf32>
    %92 = arith.addf %88, %91 : vector<8x128xf32>
    %93 = math.tanh %92 : vector<8x128xf32>
    %94 = arith.subf %66, %93 : vector<8x128xf32>
    %95 = arith.mulf %87, %94 : vector<8x128xf32>
    %96 = arith.addf %93, %95 : vector<8x128xf32>
    %c3_i32 = arith.constant 3 : i32
    %97 = arith.index_cast %c3_i32 : i32 to index
    %c0_25 = arith.constant 0 : index
    %c0_26 = arith.constant 0 : index
    %98 = vector.load %arg2[%97, %c0_25, %c0_26] : memref<4x8x384xf32, #tpu.memory_space<vmem>>, vector<1x8x384xf32>
    %99 = vector.shape_cast %98 : vector<1x8x384xf32> to vector<8x384xf32>
    %c0_27 = arith.constant 0 : index
    %c0_28 = arith.constant 0 : index
    %100 = vector.load %arg3[%c0_27, %c0_28] : memref<128x384xf32, #tpu.memory_space<vmem>>, vector<128x384xf32>
    %cst_29 = arith.constant dense<0.000000e+00> : vector<8x384xf32>
    %101 = tpu.matmul %96, %100, %cst_29 {dimension_numbers = #tpu.dot_dimension_numbers<[1], [0], [0], [1], [0, 0, 1, 1], [], []>} : vector<8x128xf32>, vector<128x384xf32>, vector<8x384xf32> -> vector<8x384xf32>
    %102 = vector.extract_strided_slice %99 {offsets = [0, 0], sizes = [8, 128], strides = [1, 1]} : vector<8x384xf32> to vector<8x128xf32>
    %103 = vector.extract_strided_slice %101 {offsets = [0, 0], sizes = [8, 128], strides = [1, 1]} : vector<8x384xf32> to vector<8x128xf32>
    %104 = arith.addf %102, %103 : vector<8x128xf32>
    %105 = arith.negf %104 : vector<8x128xf32>
    %106 = math.exp %105 : vector<8x128xf32>
    %cst_30 = arith.constant 1.000000e+00 : f32
    %107 = vector.broadcast %cst_30 : f32 to vector<8x128xf32>
    %108 = arith.addf %107, %106 : vector<8x128xf32>
    %109 = arith.divf %107, %108 : vector<8x128xf32>
    %110 = vector.extract_strided_slice %99 {offsets = [0, 128], sizes = [8, 128], strides = [1, 1]} : vector<8x384xf32> to vector<8x128xf32>
    %111 = vector.extract_strided_slice %101 {offsets = [0, 128], sizes = [8, 128], strides = [1, 1]} : vector<8x384xf32> to vector<8x128xf32>
    %112 = arith.addf %110, %111 : vector<8x128xf32>
    %113 = arith.negf %112 : vector<8x128xf32>
    %114 = math.exp %113 : vector<8x128xf32>
    %cst_31 = arith.constant 1.000000e+00 : f32
    %115 = vector.broadcast %cst_31 : f32 to vector<8x128xf32>
    %116 = arith.addf %115, %114 : vector<8x128xf32>
    %117 = arith.divf %115, %116 : vector<8x128xf32>
    %118 = vector.extract_strided_slice %99 {offsets = [0, 256], sizes = [8, 128], strides = [1, 1]} : vector<8x384xf32> to vector<8x128xf32>
    %119 = vector.extract_strided_slice %101 {offsets = [0, 256], sizes = [8, 128], strides = [1, 1]} : vector<8x384xf32> to vector<8x128xf32>
    %120 = arith.addf %119, %5 : vector<8x128xf32>
    %121 = arith.mulf %109, %120 : vector<8x128xf32>
    %122 = arith.addf %118, %121 : vector<8x128xf32>
    %123 = math.tanh %122 : vector<8x128xf32>
    %124 = arith.subf %96, %123 : vector<8x128xf32>
    %125 = arith.mulf %117, %124 : vector<8x128xf32>
    %126 = arith.addf %123, %125 : vector<8x128xf32>
    %c4_i32 = arith.constant 4 : i32
    %c0_32 = arith.constant 0 : index
    %c0_33 = arith.constant 0 : index
    %127 = vector.load %arg8[%c0_32, %c0_33] : memref<8x128xf32, #tpu.memory_space<vmem>>, vector<8x128xf32>
    tpu.vector_store %arg8[%c0_32, %c0_33], %126 {strides = array<i32>} : memref<8x128xf32, #tpu.memory_space<vmem>>, vector<8x128xf32>,
    %c1_i32_34 = arith.constant 1 : i32
    %128 = arith.cmpi eq, %arg1, %c1_i32_34 : i32
    %129 = arith.extui %128 : i1 to i32
    %c0_i32_35 = arith.constant 0 : i32
    %130 = arith.cmpi ne, %129, %c0_i32_35 : i32
    scf.if %130 {
      %c0_36 = arith.constant 0 : index
      %c0_37 = arith.constant 0 : index
      %131 = vector.load %arg5[%c0_36, %c0_37] : memref<128x128xf32, #tpu.memory_space<vmem>>, vector<128x128xf32>
      %cst_38 = arith.constant dense<0.000000e+00> : vector<8x128xf32>
      %132 = tpu.matmul %126, %131, %cst_38 {dimension_numbers = #tpu.dot_dimension_numbers<[1], [0], [0], [1], [0, 0, 1, 1], [], []>} : vector<8x128xf32>, vector<128x128xf32>, vector<8x128xf32> -> vector<8x128xf32>
      %c0_39 = arith.constant 0 : index
      %c0_40 = arith.constant 0 : index
      %133 = vector.load %arg6[%c0_39, %c0_40] : memref<1x128xf32, #tpu.memory_space<vmem>>, vector<1x128xf32>
      %134 = vector.broadcast %133 : vector<1x128xf32> to vector<8x128xf32>
      %135 = arith.addf %132, %134 : vector<8x128xf32>
      %c0_41 = arith.constant 0 : index
      %c0_42 = arith.constant 0 : index
      %136 = vector.load %arg7[%c0_41, %c0_42] : memref<8x128xf32, #tpu.memory_space<vmem>>, vector<8x128xf32>
      tpu.vector_store %arg7[%c0_41, %c0_42], %135 {strides = array<i32>} : memref<8x128xf32, #tpu.memory_space<vmem>>, vector<8x128xf32>,
    } else {
    }
    return
  }
  func.func @transform_0(%arg0: i32, %arg1: i32) -> (i32, i32, i32) {
    %c0_i32 = arith.constant 0 : i32
    %c0_i32_0 = arith.constant 0 : i32
    return %arg1, %arg0, %c0_i32 : i32, i32, i32
  }
  func.func @transform_1(%arg0: i32, %arg1: i32) -> (i32, i32) {
    %c0_i32 = arith.constant 0 : i32
    %c0_i32_0 = arith.constant 0 : i32
    %c0_i32_1 = arith.constant 0 : i32
    return %c0_i32, %c0_i32_0 : i32, i32
  }
  func.func @transform_2(%arg0: i32, %arg1: i32) -> (i32, i32) {
    %c0_i32 = arith.constant 0 : i32
    %c0_i32_0 = arith.constant 0 : i32
    %c0_i32_1 = arith.constant 0 : i32
    return %c0_i32, %c0_i32_0 : i32, i32
  }
  func.func @transform_3(%arg0: i32, %arg1: i32) -> (i32, i32) {
    %c0_i32 = arith.constant 0 : i32
    %c0_i32_0 = arith.constant 0 : i32
    %c0_i32_1 = arith.constant 0 : i32
    return %c0_i32, %c0_i32_0 : i32, i32
  }
  func.func @transform_4(%arg0: i32, %arg1: i32) -> (i32, i32) {
    %c0_i32 = arith.constant 0 : i32
    %c0_i32_0 = arith.constant 0 : i32
    %c0_i32_1 = arith.constant 0 : i32
    return %c0_i32, %c0_i32_0 : i32, i32
  }
  func.func @transform_5(%arg0: i32, %arg1: i32) -> (i32, i32) {
    %c0_i32 = arith.constant 0 : i32
    %c0_i32_0 = arith.constant 0 : i32
    return %arg0, %c0_i32 : i32, i32
  }
}

</mosaic_0001>

<llo_original>
// kernel: gru_model_forward.1
$region0: #{gru_model_forward.1}
  #allocation0 [shape = 'u32[]', space=smem, size = 0x4, offset = 0x4, fixed_abs, tag = 'smem constant byte address 0x4 - core index']
  #allocation1 [shape = 'u32[144,128]{1,0:T(1,128)}', space=vmem, size = 0x12000, scoped, tag = 'internal scratch']
  #allocation2 [shape = 'f32[8,128]{1,0:T(8,128)}', space=vmem, size = 0x1000, scoped, tag = 'scratch operand']
  %s0 = inlined_call_operand.vmem [shape: f32[8,8,384], index: 0, kind: input, shape index: {}]
  %s1 = inlined_call_operand.vmem [shape: f32[128,384], index: 1, kind: input, shape index: {}]
  %s2 = inlined_call_operand.vmem [shape: f32[1,128], index: 2, kind: input, shape index: {}]
  %s3 = inlined_call_operand.vmem [shape: f32[128,128], index: 3, kind: input, shape index: {}]
  %s4 = inlined_call_operand.vmem [shape: f32[1,128], index: 4, kind: input, shape index: {}]
  %s5 = inlined_call_operand.vmem [shape: f32[8,128], index: 5, kind: output, shape index: {}]
  %s6 = sld [smem:[#allocation0]]
  $region61: #{gru_model_forward.1} parent=0
    _
  %s8 = ssub.s32 1, %s6
  %s9 = scalar_select 0, %s8, %s6
  loop: start=0, step=1, limit=4
  $region2: #{gru_model_forward.1} parent=0 // loop_pre_header
    _
  $region3: #{gru_model_forward.1} parent=0 // loop_header
    %s11 = sphi 0, %s15
    %p12 = scmp.ge.s32.totalorder %s11, 4
    %s18 = sphi 0, %s30
    %s19 = sphi 0, %s26
    %s20 = sphi 0, %s18
    %s21 = sphi 0, %s19
    %s22 = sphi 0, %s20
    %s23 = sphi 0, %s21
    %s35 = sphi 0, %s37
    %s38 = sphi 0, %s35
    %s39 = sphi 0, %s38
    %s55 = sphi 0, %s39
    %s59 = sphi 0, %s59
    %s61 = sphi 0, %s59
    %s62 = sphi 0, %s61
    %s76 = sphi 0, %s62
    %s80 = sphi 0, %s80
    %s82 = sphi 0, %s80
    %s83 = sphi 0, %s82
    %s97 = sphi 0, %s83
    %s101 = sphi 0, %s101
    %s103 = sphi 0, %s101
    %s104 = sphi 0, %s103
    %s118 = sphi 0, %s104
    %s122 = sphi 0, %s122
    %s124 = sphi 0, %s122
    %s125 = sphi 0, %s124
    %s139 = sphi 0, %s125
    %s145 = sphi 0, %s147
    %s148 = sphi 0, %s145
    %s149 = sphi 0, %s148
    %s165 = sphi 0, %s149
  $region4: #{gru_model_forward.1} parent=0 // loop_header_branch
    %14 = sbr.rel (%p12) target = $region8
  $region5: #{gru_model_forward.1} parent=0 // loop_body
    %s16 = ssub.s32 %s11, 1
    %s17 = ssub.s32 %s11, 2
    %s24 = sadd.s32 1, %s19
    %p25 = scmp.ge.s32.totalorder %s24, 2
    %s26 = scalar_select %p25, 0, %s24
    %s27 = sadd.s32 1, %s18
    %s28 = scalar_select %p25, %s27, %s18
    %p29 = scmp.ge.s32.totalorder %s28, 1
    %s30 = scalar_select %p29, 0, %s28
    %s31 = ssub.s32 %s19, %s26
    %s32 = ssub.s32 %s18, %s30
    %s33 = sor.u32 %s31, %s32
    %p34 = scmp.eq.s32.totalorder %s33, 0
    %s36 = sadd.s32 %s35, 1
    %s37 = scalar_select %p34, %s35, %s36
    %p40 = pneg %p34
    %p41 = scmp.eq.s32.totalorder %s11, 1
    %p42 = por %p40, %p41
    %p43 = scmp.ne.s32.totalorder %s35, %s38
    %p44 = scmp.eq.s32.totalorder %s11, 0
    %p45 = por %p43, %p44
    %p46 = scmp.ne.s32.totalorder %s35, %s38
    %p47 = scmp.eq.s32.totalorder %s16, 1
    %p48 = por %p46, %p47
    %p49 = scmp.ne.s32.totalorder %s38, %s39
    %p50 = scmp.eq.s32.totalorder %s16, 0
    %p51 = por %p49, %p50
    %p52 = scmp.ne.s32.totalorder %s38, %s39
    %p53 = scmp.eq.s32.totalorder %s17, 1
    %p54 = por %p52, %p53
    %p56 = scmp.ne.s32.totalorder %s39, %s55
    %p57 = scmp.eq.s32.totalorder %s17, 0
    %p58 = por %p56, %p57
    %s60 = sadd.s32 %s59, 1
    %p63 = scmp.eq.s32.totalorder %s11, 1
    %p64 = scmp.ne.s32.totalorder %s59, %s61
    %p65 = scmp.eq.s32.totalorder %s11, 0
    %p66 = por %p64, %p65
    %p67 = scmp.ne.s32.totalorder %s59, %s61
    %p68 = scmp.eq.s32.totalorder %s16, 1
    %p69 = por %p67, %p68
    %p70 = scmp.ne.s32.totalorder %s61, %s62
    %p71 = scmp.eq.s32.totalorder %s16, 0
    %p72 = por %p70, %p71
    %p73 = scmp.ne.s32.totalorder %s61, %s62
    %p74 = scmp.eq.s32.totalorder %s17, 1
    %p75 = por %p73, %p74
    %p77 = scmp.ne.s32.totalorder %s62, %s76
    %p78 = scmp.eq.s32.totalorder %s17, 0
    %p79 = por %p77, %p78
    %s81 = sadd.s32 %s80, 1
    %p84 = scmp.eq.s32.totalorder %s11, 1
    %p85 = scmp.ne.s32.totalorder %s80, %s82
    %p86 = scmp.eq.s32.totalorder %s11, 0
    %p87 = por %p85, %p86
    %p88 = scmp.ne.s32.totalorder %s80, %s82
    %p89 = scmp.eq.s32.totalorder %s16, 1
    %p90 = por %p88, %p89
    %p91 = scmp.ne.s32.totalorder %s82, %s83
    %p92 = scmp.eq.s32.totalorder %s16, 0
    %p93 = por %p91, %p92
    %p94 = scmp.ne.s32.totalorder %s82, %s83
    %p95 = scmp.eq.s32.totalorder %s17, 1
    %p96 = por %p94, %p95
    %p98 = scmp.ne.s32.totalorder %s83, %s97
    %p99 = scmp.eq.s32.totalorder %s17, 0
    %p100 = por %p98, %p99
    %s102 = sadd.s32 %s101, 1
    %p105 = scmp.eq.s32.totalorder %s11, 1
    %p106 = scmp.ne.s32.totalorder %s101, %s103
    %p107 = scmp.eq.s32.totalorder %s11, 0
    %p108 = por %p106, %p107
    %p109 = scmp.ne.s32.totalorder %s101, %s103
    %p110 = scmp.eq.s32.totalorder %s16, 1
    %p111 = por %p109, %p110
    %p112 = scmp.ne.s32.totalorder %s103, %s104
    %p113 = scmp.eq.s32.totalorder %s16, 0
    %p114 = por %p112, %p113
    %p115 = scmp.ne.s32.totalorder %s103, %s104
    %p116 = scmp.eq.s32.totalorder %s17, 1
    %p117 = por %p115, %p116
    %p119 = scmp.ne.s32.totalorder %s104, %s118
    %p120 = scmp.eq.s32.totalorder %s17, 0
    %p121 = por %p119, %p120
    %s123 = sadd.s32 %s122, 1
    %p126 = scmp.eq.s32.totalorder %s11, 1
    %p127 = scmp.ne.s32.totalorder %s122, %s124
    %p128 = scmp.eq.s32.totalorder %s11, 0
    %p129 = por %p127, %p128
    %p130 = scmp.ne.s32.totalorder %s122, %s124
    %p131 = scmp.eq.s32.totalorder %s16, 1
    %p132 = por %p130, %p131
    %p133 = scmp.ne.s32.totalorder %s124, %s125
    %p134 = scmp.eq.s32.totalorder %s16, 0
    %p135 = por %p133, %p134
    %p136 = scmp.ne.s32.totalorder %s124, %s125
    %p137 = scmp.eq.s32.totalorder %s17, 1
    %p138 = por %p136, %p137
    %p140 = scmp.ne.s32.totalorder %s125, %s139
    %p141 = scmp.eq.s32.totalorder %s17, 0
    %p142 = por %p140, %p141
    %s143 = ssub.s32 %s18, %s30
    %p144 = scmp.eq.s32.totalorder %s143, 0
    %s146 = sadd.s32 %s145, 1
    %s147 = scalar_select %p144, %s145, %s146
    %p150 = pneg %p144
    %p151 = scmp.eq.s32.totalorder %s11, 1
    %p152 = por %p150, %p151
    %p153 = scmp.ne.s32.totalorder %s145, %s148
    %p154 = scmp.eq.s32.totalorder %s11, 0
    %p155 = por %p153, %p154
    %p156 = scmp.ne.s32.totalorder %s145, %s148
    %p157 = scmp.eq.s32.totalorder %s16, 1
    %p158 = por %p156, %p157
    %p159 = scmp.ne.s32.totalorder %s148, %s149
    %p160 = scmp.eq.s32.totalorder %s16, 0
    %p161 = por %p159, %p160
    %p162 = scmp.ne.s32.totalorder %s148, %s149
    %p163 = scmp.eq.s32.totalorder %s17, 1
    %p164 = por %p162, %p163
    %p166 = scmp.ne.s32.totalorder %s149, %s165
    %p167 = scmp.eq.s32.totalorder %s17, 0
    %p168 = por %p166, %p167
    %p169 = scmp.le.s32.totalorder 1, %s11
    %p170 = scmp.lt.s32.totalorder %s11, 3
    %p171 = pnand %p169, %p170
    %p172 = pneg %p171
    // Predicated region
    $region9: #{gru_model_forward.1} parent=5 // pred_check
      _
    $region10: #{gru_model_forward.1} parent=5 // pred_check_branch
      %174 = sbr.rel (%p171) target = $region12
    $region11: #{gru_model_forward.1} parent=5 // pred_region
      %s175 = ssub.s32 %s11, 1
      // Predicated region
      $region13: #{gru_model_forward.1} parent=11 // pred_check
        %p176 = pneg %p72
      $region14: #{gru_model_forward.1} parent=11 // pred_check_branch
        %178 = sbr.rel (%p176) target = $region16
      $region15: #{gru_model_forward.1} parent=11 // pred_region
        _
      $region16: #{gru_model_forward.1} parent=11 // pred_fallthru
        _
      // Predicated region
      $region17: #{gru_model_forward.1} parent=11 // pred_check
        %p179 = pneg %p93
      $region18: #{gru_model_forward.1} parent=11 // pred_check_branch
        %181 = sbr.rel (%p179) target = $region20
      $region19: #{gru_model_forward.1} parent=11 // pred_region
        _
      $region20: #{gru_model_forward.1} parent=11 // pred_fallthru
        _
      // Predicated region
      $region21: #{gru_model_forward.1} parent=11 // pred_check
        %p182 = pneg %p114
      $region22: #{gru_model_forward.1} parent=11 // pred_check_branch
        %184 = sbr.rel (%p182) target = $region24
      $region23: #{gru_model_forward.1} parent=11 // pred_region
        _
      $region24: #{gru_model_forward.1} parent=11 // pred_fallthru
        _
      // Predicated region
      $region25: #{gru_model_forward.1} parent=11 // pred_check
        %p185 = pneg %p135
      $region26: #{gru_model_forward.1} parent=11 // pred_check_branch
        %187 = sbr.rel (%p185) target = $region28
      $region27: #{gru_model_forward.1} parent=11 // pred_region
        _
      $region28: #{gru_model_forward.1} parent=11 // pred_fallthru
        _
    $region12: #{gru_model_forward.1} parent=5 // pred_fallthru
      _
    %p188 = scmp.lt.s32.totalorder %s11, 2
    // Predicated region
    $region29: #{gru_model_forward.1} parent=5 // pred_check
      %p189 = pneg %p188
    $region30: #{gru_model_forward.1} parent=5 // pred_check_branch
      %191 = sbr.rel (%p189) target = $region32
    $region31: #{gru_model_forward.1} parent=5 // pred_region
      // Predicated region
      $region33: #{gru_model_forward.1} parent=31 // pred_check
        %p192 = pneg %p45
      $region34: #{gru_model_forward.1} parent=31 // pred_check_branch
        %194 = sbr.rel (%p192) target = $region36
      $region35: #{gru_model_forward.1} parent=31 // pred_region
        %s195 = smul.u32 4, %s19
        %p196 = scmp.lt.s32.totalorder %s195, 7
        %s197 = scalar_select %p196, %s195, 7
        %p198 = scmp.lt.s32.totalorder %s18, 0
        %s199 = scalar_select %p198, %s18, 0
        %s200 = smul.addr %s199, 3
        %s201 = smul.addr %s197, 3
        %s202 = sadd.s32 %s200, %s201
        %s203 = smul.addr %s202, 8
        %s204 = scalar_lea.vmem %s0, %s203
        %s205 = smul.u32 4, %s19
      $region36: #{gru_model_forward.1} parent=31 // pred_fallthru
        _
    $region32: #{gru_model_forward.1} parent=5 // pred_fallthru
      _
    %p206 = scmp.le.s32.totalorder 1, %s11
    %p207 = scmp.lt.s32.totalorder %s11, 3
    %p208 = pnand %p206, %p207
    %p209 = pneg %p208
    // Predicated region
    $region37: #{gru_model_forward.1} parent=5 // pred_check
      _
    $region38: #{gru_model_forward.1} parent=5 // pred_check_branch
      %211 = sbr.rel (%p208) target = $region40
    $region39: #{gru_model_forward.1} parent=5 // pred_region
      %s212 = ssub.s32 %s11, 1
      %s213 = smul.u32 4, %s21
      %p214 = scmp.lt.s32.totalorder %s213, 7
      %s215 = scalar_select %p214, %s213, 7
      %p216 = scmp.lt.s32.totalorder %s20, 0
      %s217 = scalar_select %p216, %s20, 0
      %s218 = smul.addr %s217, 3
      %s219 = smul.addr %s215, 3
      %s220 = sadd.s32 %s218, %s219
      %s221 = smul.addr %s220, 8
      %s222 = scalar_lea.vmem %s0, %s221
      %p223 = pneg %p51
      %p224 = pneg %p48
      %p225 = pneg %p72
      %p226 = pneg %p69
      %p227 = pneg %p93
      %p228 = pneg %p90
      %p229 = pneg %p114
      %p230 = pneg %p111
      %p231 = pneg %p135
      %p232 = pneg %p132
      %p233 = pneg %p161
      %p234 = pneg %p158
      %p235 = scmp.lt.s32.totalorder %s20, 0
      %s236 = scalar_select %p235, %s20, 0
      %s237 = smul.addr %s236, 8
      %s238 = scalar_lea.vmem %s5, %s237
      %s239 = smul.u32 4, %s21
      %p240 = scmp.lt.s32.totalorder %s239, 7
      %s241 = scalar_select %p240, %s239, 7
      %p242 = scmp.lt.s32.totalorder %s20, 0
      %s243 = scalar_select %p242, %s20, 0
      %s244 = smul.addr %s243, 3
      %s245 = smul.addr %s241, 3
      %s246 = sadd.s32 %s244, %s245
      %s247 = smul.addr %s246, 8
      %s248 = scalar_lea.vmem %s0, %s247
      %s249 = smul.u32 4, %s21
      %p250 = scmp.lt.s32.totalorder %s20, 0
      %s251 = scalar_select %p250, %s20, 0
      %s252 = smul.addr %s251, 8
      %s253 = scalar_lea.vmem %s5, %s252
      %p254 = scmp.eq.s32.totalorder %s21, 0
      // Predicated region
      $region41: #{gru_model_forward.1} parent=39 // pred_check
        %p255 = pneg %p254
      $region42: #{gru_model_forward.1} parent=39 // pred_check_branch
        %257 = sbr.rel (%p255) target = $region44
      $region43: #{gru_model_forward.1} parent=39 // pred_region
        %258 = vst [vmem:[#allocation2] sm:$0xff] 0.0
      $region44: #{gru_model_forward.1} parent=39 // pred_fallthru
        _
      %v259 = vld [vmem:[%s2] sm:$0x1]
      %v261 = vlaneseq
      %v262 = vshrl.u32 %v261, 7
      %v263 = vsub.s32 0, %v262
      %v264 = vrot.slane %v259, %v263
      %v266 = vld [vmem:[#allocation2] sm:$0xff]
      %v267 = vld [vmem:[%s248] sm:$0xff]
      %v268 = vld [vmem:[%s248 + $0x8] sm:$0xff]
      %v269 = vld [vmem:[%s248 + $0x10] sm:$0xff]
      %v270 = vld [vmem:[%s1] sm:$0xff]
      %v271 = vld [vmem:[%s1 + $0x8] sm:$0xff]
      %v272 = vld [vmem:[%s1 + $0x10] sm:$0xff]
      %v273 = vld [vmem:[%s1 + $0x18] sm:$0xff]
      %v274 = vld [vmem:[%s1 + $0x20] sm:$0xff]
      %v275 = vld [vmem:[%s1 + $0x28] sm:$0xff]
      %v276 = vld [vmem:[%s1 + $0x30] sm:$0xff]
      %v277 = vld [vmem:[%s1 + $0x38] sm:$0xff]
      %v278 = vld [vmem:[%s1 + $0x40] sm:$0xff]
      %v279 = vld [vmem:[%s1 + $0x48] sm:$0xff]
      %v280 = vld [vmem:[%s1 + $0x50] sm:$0xff]
      %v281 = vld [vmem:[%s1 + $0x58] sm:$0xff]
      %v282 = vld [vmem:[%s1 + $0x60] sm:$0xff]
      %v283 = vld [vmem:[%s1 + $0x68] sm:$0xff]
      %v284 = vld [vmem:[%s1 + $0x70] sm:$0xff]
      %v285 = vld [vmem:[%s1 + $0x78] sm:$0xff]
      %v286 = vld [vmem:[%s1 + $0x80] sm:$0xff]
      %v287 = vld [vmem:[%s1 + $0x88] sm:$0xff]
      %v288 = vld [vmem:[%s1 + $0x90] sm:$0xff]
      %v289 = vld [vmem:[%s1 + $0x98] sm:$0xff]
      %v290 = vld [vmem:[%s1 + $0xa0] sm:$0xff]
      %v291 = vld [vmem:[%s1 + $0xa8] sm:$0xff]
      %v292 = vld [vmem:[%s1 + $0xb0] sm:$0xff]
      %v293 = vld [vmem:[%s1 + $0xb8] sm:$0xff]
      %v294 = vld [vmem:[%s1 + $0xc0] sm:$0xff]
      %v295 = vld [vmem:[%s1 + $0xc8] sm:$0xff]
      %v296 = vld [vmem:[%s1 + $0xd0] sm:$0xff]
      %v297 = vld [vmem:[%s1 + $0xd8] sm:$0xff]
      %v298 = vld [vmem:[%s1 + $0xe0] sm:$0xff]
      %v299 = vld [vmem:[%s1 + $0xe8] sm:$0xff]
      %v300 = vld [vmem:[%s1 + $0xf0] sm:$0xff]
      %v301 = vld [vmem:[%s1 + $0xf8] sm:$0xff]
      %v302 = vld [vmem:[%s1 + $0x100] sm:$0xff]
      %v303 = vld [vmem:[%s1 + $0x108] sm:$0xff]
      %v304 = vld [vmem:[%s1 + $0x110] sm:$0xff]
      %v305 = vld [vmem:[%s1 + $0x118] sm:$0xff]
      %v306 = vld [vmem:[%s1 + $0x120] sm:$0xff]
      %v307 = vld [vmem:[%s1 + $0x128] sm:$0xff]
      %v308 = vld [vmem:[%s1 + $0x130] sm:$0xff]
      %v309 = vld [vmem:[%s1 + $0x138] sm:$0xff]
      %v310 = vld [vmem:[%s1 + $0x140] sm:$0xff]
      %v311 = vld [vmem:[%s1 + $0x148] sm:$0xff]
      %v312 = vld [vmem:[%s1 + $0x150] sm:$0xff]
      %v313 = vld [vmem:[%s1 + $0x158] sm:$0xff]
      %v314 = vld [vmem:[%s1 + $0x160] sm:$0xff]
      %v315 = vld [vmem:[%s1 + $0x168] sm:$0xff]
      %v316 = vld [vmem:[%s1 + $0x170] sm:$0xff]
      %v317 = vld [vmem:[%s1 + $0x178] sm:$0xff]
      %318 = vmatprep.subr.mxu0 %v271
      %319 = vmatpush1.msra.mxu0 %v270
      %320 = vmatprep.subr.mxu0 %v274
      %321 = vmatpush1.msra.mxu0 %v273
      %322 = vmatprep.subr.mxu0 %v277
      %323 = vmatpush1.msra.mxu0 %v276
      %324 = vmatprep.subr.mxu0 %v280
      %325 = vmatpush1.msra.mxu0 %v279
      %326 = vmatprep.subr.mxu0 %v283
      %327 = vmatpush1.msra.mxu0 %v282
      %328 = vmatprep.subr.mxu0 %v286
      %329 = vmatpush1.msra.mxu0 %v285
      %330 = vmatprep.subr.mxu0 %v289
      %331 = vmatpush1.msra.mxu0 %v288
      %332 = vmatprep.subr.mxu0 %v292
      %333 = vmatpush1.msra.mxu0 %v291
      %334 = vmatprep.subr.mxu0 %v295
      %335 = vmatpush1.msra.mxu0 %v294
      %336 = vmatprep.subr.mxu0 %v298
      %337 = vmatpush1.msra.mxu0 %v297
      %338 = vmatprep.subr.mxu0 %v301
      %339 = vmatpush1.msra.mxu0 %v300
      %340 = vmatprep.subr.mxu0 %v304
      %341 = vmatpush1.msra.mxu0 %v303
      %342 = vmatprep.subr.mxu0 %v307
      %343 = vmatpush1.msra.mxu0 %v306
      %344 = vmatprep.subr.mxu0 %v310
      %345 = vmatpush1.msra.mxu0 %v309
      %346 = vmatprep.subr.mxu0 %v313
      %347 = vmatpush1.msra.mxu0 %v312
      %348 = vmatprep.subr.mxu0 %v316
      %349 = vmatpush1.msra.mxu0 %v315
      %350 = vmatprep.subr.mxu0 0.0
      %351 = vmatpush1.msra.mxu0 0.0
      %352 = vmatprep.subr.mxu0 0.0
      %353 = vmatpush1.msra.mxu0 0.0
      %354 = vmatprep.subr.mxu0 0.0
      %355 = vmatpush1.msra.mxu0 0.0
      %356 = vmatprep.subr.mxu0 0.0
      %357 = vmatpush1.msra.mxu0 0.0
      %358 = vmatprep.subr.mxu0 0.0
      %359 = vmatpush1.msra.mxu0 0.0
      %360 = vmatprep.subr.mxu0 0.0
      %361 = vmatpush1.msra.mxu0 0.0
      %362 = vmatprep.subr.mxu0 0.0
      %363 = vmatpush1.msra.mxu0 0.0
      %364 = vmatprep.subr.mxu0 0.0
      %365 = vmatpush1.msra.mxu0 0.0
      %366 = vmatprep.subr.mxu0 0.0
      %367 = vmatpush1.msra.mxu0 0.0
      %368 = vmatprep.subr.mxu0 0.0
      %369 = vmatpush1.msra.mxu0 0.0
      %370 = vmatprep.subr.mxu0 0.0
      %371 = vmatpush1.msra.mxu0 0.0
      %372 = vmatprep.subr.mxu0 0.0
      %373 = vmatpush1.msra.mxu0 0.0
      %374 = vmatprep.subr.mxu0 0.0
      %375 = vmatpush1.msra.mxu0 0.0
      %376 = vmatprep.subr.mxu0 0.0
      %377 = vmatpush1.msra.mxu0 0.0
      %378 = vmatprep.subr.mxu0 0.0
      %379 = vmatpush1.msra.mxu0 0.0
      %380 = vmatprep.subr.mxu0 0.0
      %381 = vmatpush1.msra.mxu0 0.0
      %382 = vmatprep.mubr.f32.mxu0 0.0
      %383 = vmatmul.mubr.f32.gmra.mrb[0].mxu0 %v266
      %v384 = vpop.f32.mrb[0].mxu0
      %v385 = vadd.f32 0.0, %v384
      %v386 = vpop.f32.mrb[0].mxu0
      %v387 = vadd.f32 0.0, %v386
      %388 = vdwg.mxu0
      %389 = vmatprep.subr.mxu0 0.0
      %390 = vmatpush1.msra.mxu0 %v272
      %391 = vmatprep.subr.mxu0 0.0
      %392 = vmatpush1.msra.mxu0 %v275
      %393 = vmatprep.subr.mxu0 0.0
      %394 = vmatpush1.msra.mxu0 %v278
      %395 = vmatprep.subr.mxu0 0.0
      %396 = vmatpush1.msra.mxu0 %v281
      %397 = vmatprep.subr.mxu0 0.0
      %398 = vmatpush1.msra.mxu0 %v284
      %399 = vmatprep.subr.mxu0 0.0
      %400 = vmatpush1.msra.mxu0 %v287
      %401 = vmatprep.subr.mxu0 0.0
      %402 = vmatpush1.msra.mxu0 %v290
      %403 = vmatprep.subr.mxu0 0.0
      %404 = vmatpush1.msra.mxu0 %v293
      %405 = vmatprep.subr.mxu0 0.0
      %406 = vmatpush1.msra.mxu0 %v296
      %407 = vmatprep.subr.mxu0 0.0
      %408 = vmatpush1.msra.mxu0 %v299
      %409 = vmatprep.subr.mxu0 0.0
      %410 = vmatpush1.msra.mxu0 %v302
      %411 = vmatprep.subr.mxu0 0.0
      %412 = vmatpush1.msra.mxu0 %v305
      %413 = vmatprep.subr.mxu0 0.0
      %414 = vmatpush1.msra.mxu0 %v308
      %415 = vmatprep.subr.mxu0 0.0
      %416 = vmatpush1.msra.mxu0 %v311
      %417 = vmatprep.subr.mxu0 0.0
      %418 = vmatpush1.msra.mxu0 %v314
      %419 = vmatprep.subr.mxu0 0.0
      %420 = vmatpush1.msra.mxu0 %v317
      %421 = vmatprep.subr.mxu0 0.0
      %422 = vmatpush1.msra.mxu0 0.0
      %423 = vmatprep.subr.mxu0 0.0
      %424 = vmatpush1.msra.mxu0 0.0
      %425 = vmatprep.subr.mxu0 0.0
      %426 = vmatpush1.msra.mxu0 0.0
      %427 = vmatprep.subr.mxu0 0.0
      %428 = vmatpush1.msra.mxu0 0.0
      %429 = vmatprep.subr.mxu0 0.0
      %430 = vmatpush1.msra.mxu0 0.0
      %431 = vmatprep.subr.mxu0 0.0
      %432 = vmatpush1.msra.mxu0 0.0
      %433 = vmatprep.subr.mxu0 0.0
      %434 = vmatpush1.msra.mxu0 0.0
      %435 = vmatprep.subr.mxu0 0.0
      %436 = vmatpush1.msra.mxu0 0.0
      %437 = vmatprep.subr.mxu0 0.0
      %438 = vmatpush1.msra.mxu0 0.0
      %439 = vmatprep.subr.mxu0 0.0
      %440 = vmatpush1.msra.mxu0 0.0
      %441 = vmatprep.subr.mxu0 0.0
      %442 = vmatpush1.msra.mxu0 0.0
      %443 = vmatprep.subr.mxu0 0.0
      %444 = vmatpush1.msra.mxu0 0.0
      %445 = vmatprep.subr.mxu0 0.0
      %446 = vmatpush1.msra.mxu0 0.0
      %447 = vmatprep.subr.mxu0 0.0
      %448 = vmatpush1.msra.mxu0 0.0
      %449 = vmatprep.subr.mxu0 0.0
      %450 = vmatpush1.msra.mxu0 0.0
      %451 = vmatprep.subr.mxu0 0.0
      %452 = vmatpush1.msra.mxu0 0.0
      %453 = vmatprep.mubr.f32.mxu0 0.0
      %454 = vmatmul.mubr.f32.gmra.mrb[0].mxu0 %v266
      %v455 = vpop.f32.mrb[0].mxu0
      %v456 = vadd.f32 0.0, %v455
      %v457 = vpop.f32.mrb[0].mxu0
      %458 = vdwg.mxu0
      %v459 = vadd.f32 %v267, %v385
      %v460 = vxor.u32 %v459, 2147483648
      %v461 = vmul.f32 %v460, 1.442695
      %v462 = vpow.pop %v461
      %v463 = vadd.f32 %v462, 1.0
      %v464 = vrcp.pop %v463
      %v465 = vmul.f32 1.0, %v464
      %v466 = vadd.f32 %v268, %v387
      %v467 = vxor.u32 %v466, 2147483648
      %v468 = vmul.f32 %v467, 1.442695
      %v469 = vpow.pop %v468
      %v470 = vadd.f32 %v469, 1.0
      %v471 = vrcp.pop %v470
      %v472 = vmul.f32 1.0, %v471
      %v473 = vadd.f32 %v456, %v264
      %v474 = vmul.f32 %v465, %v473
      %v475 = vadd.f32 %v269, %v474
      %v476 = vtanh.pop %v475
      %v477 = vsub.f32 %v266, %v476
      %v478 = vmul.f32 %v472, %v477
      %v479 = vadd.f32 %v476, %v478
      %s480 = scalar_lea.vmem %s248, 24
      %v481 = vld [vmem:[%s480] sm:$0xff]
      %v482 = vld [vmem:[%s480 + $0x8] sm:$0xff]
      %v483 = vld [vmem:[%s480 + $0x10] sm:$0xff]
      %484 = vmatprep.subr.mxu0 %v271
      %485 = vmatpush1.msra.mxu0 %v270
      %486 = vmatprep.subr.mxu0 %v274
      %487 = vmatpush1.msra.mxu0 %v273
      %488 = vmatprep.subr.mxu0 %v277
      %489 = vmatpush1.msra.mxu0 %v276
      %490 = vmatprep.subr.mxu0 %v280
      %491 = vmatpush1.msra.mxu0 %v279
      %492 = vmatprep.subr.mxu0 %v283
      %493 = vmatpush1.msra.mxu0 %v282
      %494 = vmatprep.subr.mxu0 %v286
      %495 = vmatpush1.msra.mxu0 %v285
      %496 = vmatprep.subr.mxu0 %v289
      %497 = vmatpush1.msra.mxu0 %v288
      %498 = vmatprep.subr.mxu0 %v292
      %499 = vmatpush1.msra.mxu0 %v291
      %500 = vmatprep.subr.mxu0 %v295
      %501 = vmatpush1.msra.mxu0 %v294
      %502 = vmatprep.subr.mxu0 %v298
      %503 = vmatpush1.msra.mxu0 %v297
      %504 = vmatprep.subr.mxu0 %v301
      %505 = vmatpush1.msra.mxu0 %v300
      %506 = vmatprep.subr.mxu0 %v304
      %507 = vmatpush1.msra.mxu0 %v303
      %508 = vmatprep.subr.mxu0 %v307
      %509 = vmatpush1.msra.mxu0 %v306
      %510 = vmatprep.subr.mxu0 %v310
      %511 = vmatpush1.msra.mxu0 %v309
      %512 = vmatprep.subr.mxu0 %v313
      %513 = vmatpush1.msra.mxu0 %v312
      %514 = vmatprep.subr.mxu0 %v316
      %515 = vmatpush1.msra.mxu0 %v315
      %516 = vmatprep.subr.mxu0 0.0
      %517 = vmatpush1.msra.mxu0 0.0
      %518 = vmatprep.subr.mxu0 0.0
      %519 = vmatpush1.msra.mxu0 0.0
      %520 = vmatprep.subr.mxu0 0.0
      %521 = vmatpush1.msra.mxu0 0.0
      %522 = vmatprep.subr.mxu0 0.0
      %523 = vmatpush1.msra.mxu0 0.0
      %524 = vmatprep.subr.mxu0 0.0
      %525 = vmatpush1.msra.mxu0 0.0
      %526 = vmatprep.subr.mxu0 0.0
      %527 = vmatpush1.msra.mxu0 0.0
      %528 = vmatprep.subr.mxu0 0.0
      %529 = vmatpush1.msra.mxu0 0.0
      %530 = vmatprep.subr.mxu0 0.0
      %531 = vmatpush1.msra.mxu0 0.0
      %532 = vmatprep.subr.mxu0 0.0
      %533 = vmatpush1.msra.mxu0 0.0
      %534 = vmatprep.subr.mxu0 0.0
      %535 = vmatpush1.msra.mxu0 0.0
      %536 = vmatprep.subr.mxu0 0.0
      %537 = vmatpush1.msra.mxu0 0.0
      %538 = vmatprep.subr.mxu0 0.0
      %539 = vmatpush1.msra.mxu0 0.0
      %540 = vmatprep.subr.mxu0 0.0
      %541 = vmatpush1.msra.mxu0 0.0
      %542 = vmatprep.subr.mxu0 0.0
      %543 = vmatpush1.msra.mxu0 0.0
      %544 = vmatprep.subr.mxu0 0.0
      %545 = vmatpush1.msra.mxu0 0.0
      %546 = vmatprep.subr.mxu0 0.0
      %547 = vmatpush1.msra.mxu0 0.0
      %548 = vmatprep.mubr.f32.mxu0 0.0
      %549 = vmatmul.mubr.f32.gmra.mrb[0].mxu0 %v479
      %v550 = vpop.f32.mrb[0].mxu0
      %v551 = vadd.f32 0.0, %v550
      %v552 = vpop.f32.mrb[0].mxu0
      %v553 = vadd.f32 0.0, %v552
      %554 = vdwg.mxu0
      %555 = vmatprep.subr.mxu0 0.0
      %556 = vmatpush1.msra.mxu0 %v272
      %557 = vmatprep.subr.mxu0 0.0
      %558 = vmatpush1.msra.mxu0 %v275
      %559 = vmatprep.subr.mxu0 0.0
      %560 = vmatpush1.msra.mxu0 %v278
      %561 = vmatprep.subr.mxu0 0.0
      %562 = vmatpush1.msra.mxu0 %v281
      %563 = vmatprep.subr.mxu0 0.0
      %564 = vmatpush1.msra.mxu0 %v284
      %565 = vmatprep.subr.mxu0 0.0
      %566 = vmatpush1.msra.mxu0 %v287
      %567 = vmatprep.subr.mxu0 0.0
      %568 = vmatpush1.msra.mxu0 %v290
      %569 = vmatprep.subr.mxu0 0.0
      %570 = vmatpush1.msra.mxu0 %v293
      %571 = vmatprep.subr.mxu0 0.0
      %572 = vmatpush1.msra.mxu0 %v296
      %573 = vmatprep.subr.mxu0 0.0
      %574 = vmatpush1.msra.mxu0 %v299
      %575 = vmatprep.subr.mxu0 0.0
      %576 = vmatpush1.msra.mxu0 %v302
      %577 = vmatprep.subr.mxu0 0.0
      %578 = vmatpush1.msra.mxu0 %v305
      %579 = vmatprep.subr.mxu0 0.0
      %580 = vmatpush1.msra.mxu0 %v308
      %581 = vmatprep.subr.mxu0 0.0
      %582 = vmatpush1.msra.mxu0 %v311
      %583 = vmatprep.subr.mxu0 0.0
      %584 = vmatpush1.msra.mxu0 %v314
      %585 = vmatprep.subr.mxu0 0.0
      %586 = vmatpush1.msra.mxu0 %v317
      %587 = vmatprep.subr.mxu0 0.0
      %588 = vmatpush1.msra.mxu0 0.0
      %589 = vmatprep.subr.mxu0 0.0
      %590 = vmatpush1.msra.mxu0 0.0
      %591 = vmatprep.subr.mxu0 0.0
      %592 = vmatpush1.msra.mxu0 0.0
      %593 = vmatprep.subr.mxu0 0.0
      %594 = vmatpush1.msra.mxu0 0.0
      %595 = vmatprep.subr.mxu0 0.0
      %596 = vmatpush1.msra.mxu0 0.0
      %597 = vmatprep.subr.mxu0 0.0
      %598 = vmatpush1.msra.mxu0 0.0
      %599 = vmatprep.subr.mxu0 0.0
      %600 = vmatpush1.msra.mxu0 0.0
      %601 = vmatprep.subr.mxu0 0.0
      %602 = vmatpush1.msra.mxu0 0.0
      %603 = vmatprep.subr.mxu0 0.0
      %604 = vmatpush1.msra.mxu0 0.0
      %605 = vmatprep.subr.mxu0 0.0
      %606 = vmatpush1.msra.mxu0 0.0
      %607 = vmatprep.subr.mxu0 0.0
      %608 = vmatpush1.msra.mxu0 0.0
      %609 = vmatprep.subr.mxu0 0.0
      %610 = vmatpush1.msra.mxu0 0.0
      %611 = vmatprep.subr.mxu0 0.0
      %612 = vmatpush1.msra.mxu0 0.0
      %613 = vmatprep.subr.mxu0 0.0
      %614 = vmatpush1.msra.mxu0 0.0
      %615 = vmatprep.subr.mxu0 0.0
      %616 = vmatpush1.msra.mxu0 0.0
      %617 = vmatprep.subr.mxu0 0.0
      %618 = vmatpush1.msra.mxu0 0.0
      %619 = vmatprep.mubr.f32.mxu0 0.0
      %620 = vmatmul.mubr.f32.gmra.mrb[0].mxu0 %v479
      %v621 = vpop.f32.mrb[0].mxu0
      %v622 = vadd.f32 0.0, %v621
      %v623 = vpop.f32.mrb[0].mxu0
      %624 = vdwg.mxu0
      %v625 = vadd.f32 %v481, %v551
      %v626 = vxor.u32 %v625, 2147483648
      %v627 = vmul.f32 %v626, 1.442695
      %v628 = vpow.pop %v627
      %v629 = vadd.f32 %v628, 1.0
      %v630 = vrcp.pop %v629
      %v631 = vmul.f32 1.0, %v630
      %v632 = vadd.f32 %v482, %v553
      %v633 = vxor.u32 %v632, 2147483648
      %v634 = vmul.f32 %v633, 1.442695
      %v635 = vpow.pop %v634
      %v636 = vadd.f32 %v635, 1.0
      %v637 = vrcp.pop %v636
      %v638 = vmul.f32 1.0, %v637
      %v639 = vadd.f32 %v622, %v264
      %v640 = vmul.f32 %v631, %v639
      %v641 = vadd.f32 %v483, %v640
      %v642 = vtanh.pop %v641
      %v643 = vsub.f32 %v479, %v642
      %v644 = vmul.f32 %v638, %v643
      %v645 = vadd.f32 %v642, %v644
      %s646 = scalar_lea.vmem %s248, 48
      %v647 = vld [vmem:[%s646] sm:$0xff]
      %v648 = vld [vmem:[%s646 + $0x8] sm:$0xff]
      %v649 = vld [vmem:[%s646 + $0x10] sm:$0xff]
      %650 = vmatprep.subr.mxu0 %v271
      %651 = vmatpush1.msra.mxu0 %v270
      %652 = vmatprep.subr.mxu0 %v274
      %653 = vmatpush1.msra.mxu0 %v273
      %654 = vmatprep.subr.mxu0 %v277
      %655 = vmatpush1.msra.mxu0 %v276
      %656 = vmatprep.subr.mxu0 %v280
      %657 = vmatpush1.msra.mxu0 %v279
      %658 = vmatprep.subr.mxu0 %v283
      %659 = vmatpush1.msra.mxu0 %v282
      %660 = vmatprep.subr.mxu0 %v286
      %661 = vmatpush1.msra.mxu0 %v285
      %662 = vmatprep.subr.mxu0 %v289
      %663 = vmatpush1.msra.mxu0 %v288
      %664 = vmatprep.subr.mxu0 %v292
      %665 = vmatpush1.msra.mxu0 %v291
      %666 = vmatprep.subr.mxu0 %v295
      %667 = vmatpush1.msra.mxu0 %v294
      %668 = vmatprep.subr.mxu0 %v298
      %669 = vmatpush1.msra.mxu0 %v297
      %670 = vmatprep.subr.mxu0 %v301
      %671 = vmatpush1.msra.mxu0 %v300
      %672 = vmatprep.subr.mxu0 %v304
      %673 = vmatpush1.msra.mxu0 %v303
      %674 = vmatprep.subr.mxu0 %v307
      %675 = vmatpush1.msra.mxu0 %v306
      %676 = vmatprep.subr.mxu0 %v310
      %677 = vmatpush1.msra.mxu0 %v309
      %678 = vmatprep.subr.mxu0 %v313
      %679 = vmatpush1.msra.mxu0 %v312
      %680 = vmatprep.subr.mxu0 %v316
      %681 = vmatpush1.msra.mxu0 %v315
      %682 = vmatprep.subr.mxu0 0.0
      %683 = vmatpush1.msra.mxu0 0.0
      %684 = vmatprep.subr.mxu0 0.0
      %685 = vmatpush1.msra.mxu0 0.0
      %686 = vmatprep.subr.mxu0 0.0
      %687 = vmatpush1.msra.mxu0 0.0
      %688 = vmatprep.subr.mxu0 0.0
      %689 = vmatpush1.msra.mxu0 0.0
      %690 = vmatprep.subr.mxu0 0.0
      %691 = vmatpush1.msra.mxu0 0.0
      %692 = vmatprep.subr.mxu0 0.0
      %693 = vmatpush1.msra.mxu0 0.0
      %694 = vmatprep.subr.mxu0 0.0
      %695 = vmatpush1.msra.mxu0 0.0
      %696 = vmatprep.subr.mxu0 0.0
      %697 = vmatpush1.msra.mxu0 0.0
      %698 = vmatprep.subr.mxu0 0.0
      %699 = vmatpush1.msra.mxu0 0.0
      %700 = vmatprep.subr.mxu0 0.0
      %701 = vmatpush1.msra.mxu0 0.0
      %702 = vmatprep.subr.mxu0 0.0
      %703 = vmatpush1.msra.mxu0 0.0
      %704 = vmatprep.subr.mxu0 0.0
      %705 = vmatpush1.msra.mxu0 0.0
      %706 = vmatprep.subr.mxu0 0.0
      %707 = vmatpush1.msra.mxu0 0.0
      %708 = vmatprep.subr.mxu0 0.0
      %709 = vmatpush1.msra.mxu0 0.0
      %710 = vmatprep.subr.mxu0 0.0
      %711 = vmatpush1.msra.mxu0 0.0
      %712 = vmatprep.subr.mxu0 0.0
      %713 = vmatpush1.msra.mxu0 0.0
      %714 = vmatprep.mubr.f32.mxu0 0.0
      %715 = vmatmul.mubr.f32.gmra.mrb[0].mxu0 %v645
      %v716 = vpop.f32.mrb[0].mxu0
      %v717 = vadd.f32 0.0, %v716
      %v718 = vpop.f32.mrb[0].mxu0
      %v719 = vadd.f32 0.0, %v718
      %720 = vdwg.mxu0
      %721 = vmatprep.subr.mxu0 0.0
      %722 = vmatpush1.msra.mxu0 %v272
      %723 = vmatprep.subr.mxu0 0.0
      %724 = vmatpush1.msra.mxu0 %v275
      %725 = vmatprep.subr.mxu0 0.0
      %726 = vmatpush1.msra.mxu0 %v278
      %727 = vmatprep.subr.mxu0 0.0
      %728 = vmatpush1.msra.mxu0 %v281
      %729 = vmatprep.subr.mxu0 0.0
      %730 = vmatpush1.msra.mxu0 %v284
      %731 = vmatprep.subr.mxu0 0.0
      %732 = vmatpush1.msra.mxu0 %v287
      %733 = vmatprep.subr.mxu0 0.0
      %734 = vmatpush1.msra.mxu0 %v290
      %735 = vmatprep.subr.mxu0 0.0
      %736 = vmatpush1.msra.mxu0 %v293
      %737 = vmatprep.subr.mxu0 0.0
      %738 = vmatpush1.msra.mxu0 %v296
      %739 = vmatprep.subr.mxu0 0.0
      %740 = vmatpush1.msra.mxu0 %v299
      %741 = vmatprep.subr.mxu0 0.0
      %742 = vmatpush1.msra.mxu0 %v302
      %743 = vmatprep.subr.mxu0 0.0
      %744 = vmatpush1.msra.mxu0 %v305
      %745 = vmatprep.subr.mxu0 0.0
      %746 = vmatpush1.msra.mxu0 %v308
      %747 = vmatprep.subr.mxu0 0.0
      %748 = vmatpush1.msra.mxu0 %v311
      %749 = vmatprep.subr.mxu0 0.0
      %750 = vmatpush1.msra.mxu0 %v314
      %751 = vmatprep.subr.mxu0 0.0
      %752 = vmatpush1.msra.mxu0 %v317
      %753 = vmatprep.subr.mxu0 0.0
      %754 = vmatpush1.msra.mxu0 0.0
      %755 = vmatprep.subr.mxu0 0.0
      %756 = vmatpush1.msra.mxu0 0.0
      %757 = vmatprep.subr.mxu0 0.0
      %758 = vmatpush1.msra.mxu0 0.0
      %759 = vmatprep.subr.mxu0 0.0
      %760 = vmatpush1.msra.mxu0 0.0
      %761 = vmatprep.subr.mxu0 0.0
      %762 = vmatpush1.msra.mxu0 0.0
      %763 = vmatprep.subr.mxu0 0.0
      %764 = vmatpush1.msra.mxu0 0.0
      %765 = vmatprep.subr.mxu0 0.0
      %766 = vmatpush1.msra.mxu0 0.0
      %767 = vmatprep.subr.mxu0 0.0
      %768 = vmatpush1.msra.mxu0 0.0
      %769 = vmatprep.subr.mxu0 0.0
      %770 = vmatpush1.msra.mxu0 0.0
      %771 = vmatprep.subr.mxu0 0.0
      %772 = vmatpush1.msra.mxu0 0.0
      %773 = vmatprep.subr.mxu0 0.0
      %774 = vmatpush1.msra.mxu0 0.0
      %775 = vmatprep.subr.mxu0 0.0
      %776 = vmatpush1.msra.mxu0 0.0
      %777 = vmatprep.subr.mxu0 0.0
      %778 = vmatpush1.msra.mxu0 0.0
      %779 = vmatprep.subr.mxu0 0.0
      %780 = vmatpush1.msra.mxu0 0.0
      %781 = vmatprep.subr.mxu0 0.0
      %782 = vmatpush1.msra.mxu0 0.0
      %783 = vmatprep.subr.mxu0 0.0
      %784 = vmatpush1.msra.mxu0 0.0
      %785 = vmatprep.mubr.f32.mxu0 0.0
      %786 = vmatmul.mubr.f32.gmra.mrb[0].mxu0 %v645
      %v787 = vpop.f32.mrb[0].mxu0
      %v788 = vadd.f32 0.0, %v787
      %v789 = vpop.f32.mrb[0].mxu0
      %790 = vdwg.mxu0
      %v791 = vadd.f32 %v647, %v717
      %v792 = vxor.u32 %v791, 2147483648
      %v793 = vmul.f32 %v792, 1.442695
      %v794 = vpow.pop %v793
      %v795 = vadd.f32 %v794, 1.0
      %v796 = vrcp.pop %v795
      %v797 = vmul.f32 1.0, %v796
      %v798 = vadd.f32 %v648, %v719
      %v799 = vxor.u32 %v798, 2147483648
      %v800 = vmul.f32 %v799, 1.442695
      %v801 = vpow.pop %v800
      %v802 = vadd.f32 %v801, 1.0
      %v803 = vrcp.pop %v802
      %v804 = vmul.f32 1.0, %v803
      %v805 = vadd.f32 %v788, %v264
      %v806 = vmul.f32 %v797, %v805
      %v807 = vadd.f32 %v649, %v806
      %v808 = vtanh.pop %v807
      %v809 = vsub.f32 %v645, %v808
      %v810 = vmul.f32 %v804, %v809
      %v811 = vadd.f32 %v808, %v810
      %s812 = scalar_lea.vmem %s248, 72
      %v813 = vld [vmem:[%s812] sm:$0xff]
      %v814 = vld [vmem:[%s812 + $0x8] sm:$0xff]
      %v815 = vld [vmem:[%s812 + $0x10] sm:$0xff]
      %816 = vmatprep.subr.mxu0 %v271
      %817 = vmatpush1.msra.mxu0 %v270
      %818 = vmatprep.subr.mxu0 %v274
      %819 = vmatpush1.msra.mxu0 %v273
      %820 = vmatprep.subr.mxu0 %v277
      %821 = vmatpush1.msra.mxu0 %v276
      %822 = vmatprep.subr.mxu0 %v280
      %823 = vmatpush1.msra.mxu0 %v279
      %824 = vmatprep.subr.mxu0 %v283
      %825 = vmatpush1.msra.mxu0 %v282
      %826 = vmatprep.subr.mxu0 %v286
      %827 = vmatpush1.msra.mxu0 %v285
      %828 = vmatprep.subr.mxu0 %v289
      %829 = vmatpush1.msra.mxu0 %v288
      %830 = vmatprep.subr.mxu0 %v292
      %831 = vmatpush1.msra.mxu0 %v291
      %832 = vmatprep.subr.mxu0 %v295
      %833 = vmatpush1.msra.mxu0 %v294
      %834 = vmatprep.subr.mxu0 %v298
      %835 = vmatpush1.msra.mxu0 %v297
      %836 = vmatprep.subr.mxu0 %v301
      %837 = vmatpush1.msra.mxu0 %v300
      %838 = vmatprep.subr.mxu0 %v304
      %839 = vmatpush1.msra.mxu0 %v303
      %840 = vmatprep.subr.mxu0 %v307
      %841 = vmatpush1.msra.mxu0 %v306
      %842 = vmatprep.subr.mxu0 %v310
      %843 = vmatpush1.msra.mxu0 %v309
      %844 = vmatprep.subr.mxu0 %v313
      %845 = vmatpush1.msra.mxu0 %v312
      %846 = vmatprep.subr.mxu0 %v316
      %847 = vmatpush1.msra.mxu0 %v315
      %848 = vmatprep.subr.mxu0 0.0
      %849 = vmatpush1.msra.mxu0 0.0
      %850 = vmatprep.subr.mxu0 0.0
      %851 = vmatpush1.msra.mxu0 0.0
      %852 = vmatprep.subr.mxu0 0.0
      %853 = vmatpush1.msra.mxu0 0.0
      %854 = vmatprep.subr.mxu0 0.0
      %855 = vmatpush1.msra.mxu0 0.0
      %856 = vmatprep.subr.mxu0 0.0
      %857 = vmatpush1.msra.mxu0 0.0
      %858 = vmatprep.subr.mxu0 0.0
      %859 = vmatpush1.msra.mxu0 0.0
      %860 = vmatprep.subr.mxu0 0.0
      %861 = vmatpush1.msra.mxu0 0.0
      %862 = vmatprep.subr.mxu0 0.0
      %863 = vmatpush1.msra.mxu0 0.0
      %864 = vmatprep.subr.mxu0 0.0
      %865 = vmatpush1.msra.mxu0 0.0
      %866 = vmatprep.subr.mxu0 0.0
      %867 = vmatpush1.msra.mxu0 0.0
      %868 = vmatprep.subr.mxu0 0.0
      %869 = vmatpush1.msra.mxu0 0.0
      %870 = vmatprep.subr.mxu0 0.0
      %871 = vmatpush1.msra.mxu0 0.0
      %872 = vmatprep.subr.mxu0 0.0
      %873 = vmatpush1.msra.mxu0 0.0
      %874 = vmatprep.subr.mxu0 0.0
      %875 = vmatpush1.msra.mxu0 0.0
      %876 = vmatprep.subr.mxu0 0.0
      %877 = vmatpush1.msra.mxu0 0.0
      %878 = vmatprep.subr.mxu0 0.0
      %879 = vmatpush1.msra.mxu0 0.0
      %880 = vmatprep.mubr.f32.mxu0 0.0
      %881 = vmatmul.mubr.f32.gmra.mrb[0].mxu0 %v811
      %v882 = vpop.f32.mrb[0].mxu0
      %v883 = vadd.f32 0.0, %v882
      %v884 = vpop.f32.mrb[0].mxu0
      %v885 = vadd.f32 0.0, %v884
      %886 = vdwg.mxu0
      %887 = vmatprep.subr.mxu0 0.0
      %888 = vmatpush1.msra.mxu0 %v272
      %889 = vmatprep.subr.mxu0 0.0
      %890 = vmatpush1.msra.mxu0 %v275
      %891 = vmatprep.subr.mxu0 0.0
      %892 = vmatpush1.msra.mxu0 %v278
      %893 = vmatprep.subr.mxu0 0.0
      %894 = vmatpush1.msra.mxu0 %v281
      %895 = vmatprep.subr.mxu0 0.0
      %896 = vmatpush1.msra.mxu0 %v284
      %897 = vmatprep.subr.mxu0 0.0
      %898 = vmatpush1.msra.mxu0 %v287
      %899 = vmatprep.subr.mxu0 0.0
      %900 = vmatpush1.msra.mxu0 %v290
      %901 = vmatprep.subr.mxu0 0.0
      %902 = vmatpush1.msra.mxu0 %v293
      %903 = vmatprep.subr.mxu0 0.0
      %904 = vmatpush1.msra.mxu0 %v296
      %905 = vmatprep.subr.mxu0 0.0
      %906 = vmatpush1.msra.mxu0 %v299
      %907 = vmatprep.subr.mxu0 0.0
      %908 = vmatpush1.msra.mxu0 %v302
      %909 = vmatprep.subr.mxu0 0.0
      %910 = vmatpush1.msra.mxu0 %v305
      %911 = vmatprep.subr.mxu0 0.0
      %912 = vmatpush1.msra.mxu0 %v308
      %913 = vmatprep.subr.mxu0 0.0
      %914 = vmatpush1.msra.mxu0 %v311
      %915 = vmatprep.subr.mxu0 0.0
      %916 = vmatpush1.msra.mxu0 %v314
      %917 = vmatprep.subr.mxu0 0.0
      %918 = vmatpush1.msra.mxu0 %v317
      %919 = vmatprep.subr.mxu0 0.0
      %920 = vmatpush1.msra.mxu0 0.0
      %921 = vmatprep.subr.mxu0 0.0
      %922 = vmatpush1.msra.mxu0 0.0
      %923 = vmatprep.subr.mxu0 0.0
      %924 = vmatpush1.msra.mxu0 0.0
      %925 = vmatprep.subr.mxu0 0.0
      %926 = vmatpush1.msra.mxu0 0.0
      %927 = vmatprep.subr.mxu0 0.0
      %928 = vmatpush1.msra.mxu0 0.0
      %929 = vmatprep.subr.mxu0 0.0
      %930 = vmatpush1.msra.mxu0 0.0
      %931 = vmatprep.subr.mxu0 0.0
      %932 = vmatpush1.msra.mxu0 0.0
      %933 = vmatprep.subr.mxu0 0.0
      %934 = vmatpush1.msra.mxu0 0.0
      %935 = vmatprep.subr.mxu0 0.0
      %936 = vmatpush1.msra.mxu0 0.0
      %937 = vmatprep.subr.mxu0 0.0
      %938 = vmatpush1.msra.mxu0 0.0
      %939 = vmatprep.subr.mxu0 0.0
      %940 = vmatpush1.msra.mxu0 0.0
      %941 = vmatprep.subr.mxu0 0.0
      %942 = vmatpush1.msra.mxu0 0.0
      %943 = vmatprep.subr.mxu0 0.0
      %944 = vmatpush1.msra.mxu0 0.0
      %945 = vmatprep.subr.mxu0 0.0
      %946 = vmatpush1.msra.mxu0 0.0
      %947 = vmatprep.subr.mxu0 0.0
      %948 = vmatpush1.msra.mxu0 0.0
      %949 = vmatprep.subr.mxu0 0.0
      %950 = vmatpush1.msra.mxu0 0.0
      %951 = vmatprep.mubr.f32.mxu0 0.0
      %952 = vmatmul.mubr.f32.gmra.mrb[0].mxu0 %v811
      %v953 = vpop.f32.mrb[0].mxu0
      %v954 = vadd.f32 0.0, %v953
      %v955 = vpop.f32.mrb[0].mxu0
      %956 = vdwg.mxu0
      %v957 = vadd.f32 %v813, %v883
      %v958 = vxor.u32 %v957, 2147483648
      %v959 = vmul.f32 %v958, 1.442695
      %v960 = vpow.pop %v959
      %v961 = vadd.f32 %v960, 1.0
      %v962 = vrcp.pop %v961
      %v963 = vmul.f32 1.0, %v962
      %v964 = vadd.f32 %v814, %v885
      %v965 = vxor.u32 %v964, 2147483648
      %v966 = vmul.f32 %v965, 1.442695
      %v967 = vpow.pop %v966
      %v968 = vadd.f32 %v967, 1.0
      %v969 = vrcp.pop %v968
      %v970 = vmul.f32 1.0, %v969
      %v971 = vadd.f32 %v954, %v264
      %v972 = vmul.f32 %v963, %v971
      %v973 = vadd.f32 %v815, %v972
      %v974 = vtanh.pop %v973
      %v975 = vsub.f32 %v811, %v974
      %v976 = vmul.f32 %v970, %v975
      %v977 = vadd.f32 %v974, %v976
      %978 = vst [vmem:[#allocation2] sm:$0xff] %v977
      %p979 = scmp.eq.s32.totalorder %s21, 1
      // Predicated region
      $region45: #{gru_model_forward.1} parent=39 // pred_check
        %p980 = pneg %p979
      $region46: #{gru_model_forward.1} parent=39 // pred_check_branch
        %982 = sbr.rel (%p980) target = $region48
      $region47: #{gru_model_forward.1} parent=39 // pred_region
        %v983 = vld [vmem:[%s3] sm:$0xff]
        %v984 = vld [vmem:[%s3 + $0x8] sm:$0xff]
        %v985 = vld [vmem:[%s3 + $0x10] sm:$0xff]
        %v986 = vld [vmem:[%s3 + $0x18] sm:$0xff]
        %v987 = vld [vmem:[%s3 + $0x20] sm:$0xff]
        %v988 = vld [vmem:[%s3 + $0x28] sm:$0xff]
        %v989 = vld [vmem:[%s3 + $0x30] sm:$0xff]
        %v990 = vld [vmem:[%s3 + $0x38] sm:$0xff]
        %v991 = vld [vmem:[%s3 + $0x40] sm:$0xff]
        %v992 = vld [vmem:[%s3 + $0x48] sm:$0xff]
        %v993 = vld [vmem:[%s3 + $0x50] sm:$0xff]
        %v994 = vld [vmem:[%s3 + $0x58] sm:$0xff]
        %v995 = vld [vmem:[%s3 + $0x60] sm:$0xff]
        %v996 = vld [vmem:[%s3 + $0x68] sm:$0xff]
        %v997 = vld [vmem:[%s3 + $0x70] sm:$0xff]
        %v998 = vld [vmem:[%s3 + $0x78] sm:$0xff]
        %v999 = vld [vmem:[%s4] sm:$0x1]
        %v1001 = vlaneseq
        %v1002 = vshrl.u32 %v1001, 7
        %v1003 = vsub.s32 0, %v1002
        %v1004 = vrot.slane %v999, %v1003
        %1006 = vmatprep.subr.mxu0 0.0
        %1007 = vmatpush1.msra.mxu0 %v983
        %1008 = vmatprep.subr.mxu0 0.0
        %1009 = vmatpush1.msra.mxu0 %v984
        %1010 = vmatprep.subr.mxu0 0.0
        %1011 = vmatpush1.msra.mxu0 %v985
        %1012 = vmatprep.subr.mxu0 0.0
        %1013 = vmatpush1.msra.mxu0 %v986
        %1014 = vmatprep.subr.mxu0 0.0
        %1015 = vmatpush1.msra.mxu0 %v987
        %1016 = vmatprep.subr.mxu0 0.0
        %1017 = vmatpush1.msra.mxu0 %v988
        %1018 = vmatprep.subr.mxu0 0.0
        %1019 = vmatpush1.msra.mxu0 %v989
        %1020 = vmatprep.subr.mxu0 0.0
        %1021 = vmatpush1.msra.mxu0 %v990
        %1022 = vmatprep.subr.mxu0 0.0
        %1023 = vmatpush1.msra.mxu0 %v991
        %1024 = vmatprep.subr.mxu0 0.0
        %1025 = vmatpush1.msra.mxu0 %v992
        %1026 = vmatprep.subr.mxu0 0.0
        %1027 = vmatpush1.msra.mxu0 %v993
        %1028 = vmatprep.subr.mxu0 0.0
        %1029 = vmatpush1.msra.mxu0 %v994
        %1030 = vmatprep.subr.mxu0 0.0
        %1031 = vmatpush1.msra.mxu0 %v995
        %1032 = vmatprep.subr.mxu0 0.0
        %1033 = vmatpush1.msra.mxu0 %v996
        %1034 = vmatprep.subr.mxu0 0.0
        %1035 = vmatpush1.msra.mxu0 %v997
        %1036 = vmatprep.subr.mxu0 0.0
        %1037 = vmatpush1.msra.mxu0 %v998
        %1038 = vmatprep.subr.mxu0 0.0
        %1039 = vmatpush1.msra.mxu0 0.0
        %1040 = vmatprep.subr.mxu0 0.0
        %1041 = vmatpush1.msra.mxu0 0.0
        %1042 = vmatprep.subr.mxu0 0.0
        %1043 = vmatpush1.msra.mxu0 0.0
        %1044 = vmatprep.subr.mxu0 0.0
        %1045 = vmatpush1.msra.mxu0 0.0
        %1046 = vmatprep.subr.mxu0 0.0
        %1047 = vmatpush1.msra.mxu0 0.0
        %1048 = vmatprep.subr.mxu0 0.0
        %1049 = vmatpush1.msra.mxu0 0.0
        %1050 = vmatprep.subr.mxu0 0.0
        %1051 = vmatpush1.msra.mxu0 0.0
        %1052 = vmatprep.subr.mxu0 0.0
        %1053 = vmatpush1.msra.mxu0 0.0
        %1054 = vmatprep.subr.mxu0 0.0
        %1055 = vmatpush1.msra.mxu0 0.0
        %1056 = vmatprep.subr.mxu0 0.0
        %1057 = vmatpush1.msra.mxu0 0.0
        %1058 = vmatprep.subr.mxu0 0.0
        %1059 = vmatpush1.msra.mxu0 0.0
        %1060 = vmatprep.subr.mxu0 0.0
        %1061 = vmatpush1.msra.mxu0 0.0
        %1062 = vmatprep.subr.mxu0 0.0
        %1063 = vmatpush1.msra.mxu0 0.0
        %1064 = vmatprep.subr.mxu0 0.0
        %1065 = vmatpush1.msra.mxu0 0.0
        %1066 = vmatprep.subr.mxu0 0.0
        %1067 = vmatpush1.msra.mxu0 0.0
        %1068 = vmatprep.subr.mxu0 0.0
        %1069 = vmatpush1.msra.mxu0 0.0
        %1070 = vmatprep.mubr.f32.mxu0 0.0
        %1071 = vmatmul.mubr.f32.gmra.mrb[0].mxu0 %v977
        %v1072 = vpop.f32.mrb[0].mxu0
        %v1073 = vadd.f32 %v1004, %v1072
        %v1074 = vpop.f32.mrb[0].mxu0
        %1075 = vdwg.mxu0
        %1076 = vst [vmem:[%s253] sm:$0xff] %v1073
      $region48: #{gru_model_forward.1} parent=39 // pred_fallthru
        _
      %p1077 = scmp.lt.s32.totalorder %s20, 0
      %s1078 = scalar_select %p1077, %s20, 0
      %s1079 = smul.addr %s1078, 8
      %s1080 = scalar_lea.vmem %s5, %s1079
      // Predicated region
      $region49: #{gru_model_forward.1} parent=39 // pred_check
        %p1081 = pneg %p158
      $region50: #{gru_model_forward.1} parent=39 // pred_check_branch
        %1083 = sbr.rel (%p1081) target = $region52
      $region51: #{gru_model_forward.1} parent=39 // pred_region
        _
      $region52: #{gru_model_forward.1} parent=39 // pred_fallthru
        _
      // Predicated region
      $region53: #{gru_model_forward.1} parent=39 // pred_check
        %p1084 = pneg %p158
      $region54: #{gru_model_forward.1} parent=39 // pred_check_branch
        %1086 = sbr.rel (%p1084) target = $region56
      $region55: #{gru_model_forward.1} parent=39 // pred_region
        %p1087 = scmp.lt.s32.totalorder %s20, 0
        %s1088 = scalar_select %p1087, %s20, 0
        %s1089 = smul.addr %s1088, 8
        %s1090 = scalar_lea.vmem %s5, %s1089
      $region56: #{gru_model_forward.1} parent=39 // pred_fallthru
        _
    $region40: #{gru_model_forward.1} parent=5 // pred_fallthru
      _
    %p1091 = scmp.le.s32.totalorder 2, %s11
    // Predicated region
    $region57: #{gru_model_forward.1} parent=5 // pred_check
      %p1092 = pneg %p1091
    $region58: #{gru_model_forward.1} parent=5 // pred_check_branch
      %1094 = sbr.rel (%p1092) target = $region60
    $region59: #{gru_model_forward.1} parent=5 // pred_region
      %s1095 = ssub.s32 %s11, 2
    $region60: #{gru_model_forward.1} parent=5 // pred_fallthru
      _
  $region6: #{gru_model_forward.1} parent=0 // loop_footer
    %s15 = sadd.s32 1, %s11
  $region7: #{gru_model_forward.1} parent=0 // loop_footer_branch
    %10 = sbr.rel target = $region3
  $region8: #{gru_model_forward.1} parent=0 // loop_exit
    _

</llo_original>
